<compile_context>
chip_gen: v6e
topology: v6e:2x2x1
jax: 0.10.0
libtpu: 0.0.40
codegen_flags: <defaults>
</compile_context>

<pallas_src>
import functools

import jax
import jax.numpy as jnp
from jax.experimental import pallas as pl
from jax.experimental.pallas import tpu as pltpu

EPS = 1e-5
LANE = 128
VMEM_LIMIT = 32 * 1024 * 1024      # scoped VMEM budget, safe on v5e/v6e/v7x


# ---------------------------------------------------------------------------
# small helpers
# ---------------------------------------------------------------------------
def _round_up(x, m):
    return (x + m - 1) // m * m


def _pad_to(a, axis, size):
    if a.shape[axis] == size:
        return a
    pad = [(0, 0)] * a.ndim
    pad[axis] = (0, size - a.shape[axis])
    return jnp.pad(a, pad)


def _choose_tm(m):
    if m >= 1024:
        return 512
    if m >= 512:
        return 256
    return max(8, _round_up(m, 8))


# ---------------------------------------------------------------------------
# Pallas kernels
# ---------------------------------------------------------------------------
def _mm_bn_kernel(x_ref, w_ref, s_ref, b_ref, o_ref, *, relu):
    # (tm,K)@(K,N) on the MXU (bf16 operands, f32 accumulate) + folded BN.
    acc = jnp.dot(x_ref[...], w_ref[...], preferred_element_type=jnp.float32)
    out = acc * s_ref[...] + b_ref[...]
    if relu:
        out = jnp.maximum(out, 0.0)
    o_ref[...] = out.astype(o_ref.dtype)


def _mm_bn_add_relu_kernel(x_ref, w_ref, s_ref, b_ref, r_ref, o_ref):
    # conv3 + bn3 + identity residual + ReLU, fully fused.
    acc = jnp.dot(x_ref[...], w_ref[...], preferred_element_type=jnp.float32)
    out = acc * s_ref[...] + b_ref[...] + r_ref[...].astype(jnp.float32)
    o_ref[...] = jnp.maximum(out, 0.0).astype(o_ref.dtype)


def _mm_bn_proj_add_relu_kernel(x_ref, w_ref, s_ref, b_ref,
                                xs_ref, ws_ref, ss_ref, bs_ref, o_ref):
    # conv3 + bn3 + (projection-shortcut conv + bn) + ReLU, fully fused.
    main = jnp.dot(x_ref[...], w_ref[...], preferred_element_type=jnp.float32)
    main = main * s_ref[...] + b_ref[...]
    sc = jnp.dot(xs_ref[...], ws_ref[...], preferred_element_type=jnp.float32)
    sc = sc * ss_ref[...] + bs_ref[...]
    o_ref[...] = jnp.maximum(main + sc, 0.0).astype(o_ref.dtype)


def _conv3x3_bn_relu_kernel(x_ref, w_ref, s_ref, b_ref, o_ref, *, stride, Ho, Wo):
    # x_ref: (S*S, Hs, Ws, Cp) phase-decomposed, spatially padded input (bf16)
    # w_ref: (9, Cp, Cp) per-tap weights (bf16);  s/b: (1, Cp) folded BN (f32)
    S = stride
    Cp = x_ref.shape[-1]
    acc = jnp.zeros((Ho * Wo, Cp), jnp.float32)
    for kh in range(3):
        for kw in range(3):
            p = (kh % S) * S + (kw % S)                 # static phase index
            patch = x_ref[p, pl.ds(kh // S, Ho), pl.ds(kw // S, Wo), :]
            acc = acc + jnp.dot(patch.reshape(Ho * Wo, Cp),
                                w_ref[kh * 3 + kw],
                                preferred_element_type=jnp.float32)
    out = jnp.maximum(acc * s_ref[...] + b_ref[...], 0.0)
    o_ref[...] = out.reshape(o_ref.shape).astype(o_ref.dtype)


# ---------------------------------------------------------------------------
# pallas_call wrappers
# ---------------------------------------------------------------------------
def _row_tiled_call(kernel, args, kinds, m, n_out, out_dtype):
    """Launch `kernel` tiled over the leading (row) axis.

    kinds[i]: "dot"  -> (m, K_i), tiled (tm, K_i), is a matmul operand
              "rows" -> (m, K_i), tiled (tm, K_i), not a matmul operand
              "full" -> replicated whole to every tile (weights / BN vectors)
    """
    tm = _choose_tm(m)
    mp = _round_up(m, tm)
    in_specs, call_args = [], []
    for a, kind in zip(args, kinds):
        if kind in ("dot", "rows"):
            if mp != m:
                a = jnp.pad(a, ((0, mp - m), (0, 0)))
            in_specs.append(pl.BlockSpec((tm, a.shape[1]), lambda i: (i, 0)))
        else:
            nd = a.ndim
            in_specs.append(pl.BlockSpec(tuple(a.shape),
                                         lambda i, nd=nd: (0,) * nd))
        call_args.append(a)

    in_bytes = sum(int(a.size) * a.dtype.itemsize for a in call_args)
    out_bytes = mp * n_out * jnp.dtype(out_dtype).itemsize
    dot_k = sum(a.shape[1] for a, kind in zip(call_args, kinds) if kind == "dot")

    out = pl.pallas_call(
        kernel,
        out_shape=jax.ShapeDtypeStruct((mp, n_out), out_dtype),
        grid=(mp // tm,),
        in_specs=in_specs,
        out_specs=pl.BlockSpec((tm, n_out), lambda i: (i, 0)),
        compiler_params=pltpu.CompilerParams(
            dimension_semantics=("parallel",),
            vmem_limit_bytes=VMEM_LIMIT),
        cost_estimate=pl.CostEstimate(
            flops=int(2 * mp * n_out * dot_k),
            transcendentals=0,
            bytes_accessed=int(in_bytes + out_bytes)),
    )(*call_args)
    return out[:m] if mp != m else out


def conv3x3_bn_relu(x_nhwc, w_taps, scale, bias, stride):
    """Fused 3x3 conv (stride, pad=1) + folded BN + ReLU; no HBM im2col."""
    n, h, w, cp = x_nhwc.shape
    ho = (h - 1) // stride + 1
    wo = (w - 1) // stride + 1
    xp = jnp.pad(x_nhwc, ((0, 0), (1, 1), (1, 1), (0, 0)))
    s = stride

    if s == 1:
        hs, ws_ = h + 2, w + 2
        xg = xp
    else:
        # Decompose into S*S unit-stride phases so every in-kernel window
        # read is an unstrided pl.ds slice (one extra cheap XLA pass).
        hs = -(-(h + 2) // s)
        ws_ = -(-(w + 2) // s)
        phases = []
        for a in range(s):
            for b in range(s):
                ph = xp[:, a::s, b::s, :]
                ph = jnp.pad(ph, ((0, 0), (0, hs - ph.shape[1]),
                                  (0, ws_ - ph.shape[2]), (0, 0)))
                phases.append(ph)
        xg = jnp.stack(phases, axis=1)
    xg = xg.reshape(n * s * s, hs, ws_, cp)

    kernel = functools.partial(_conv3x3_bn_relu_kernel, stride=s, Ho=ho, Wo=wo)
    out = pl.pallas_call(
        kernel,
        out_shape=jax.ShapeDtypeStruct((n, ho, wo, cp), jnp.bfloat16),
        grid=(n,),
        in_specs=[
            pl.BlockSpec((s * s, hs, ws_, cp), lambda i: (i, 0, 0, 0)),
            pl.BlockSpec(tuple(w_taps.shape), lambda i: (0, 0, 0)),
            pl.BlockSpec((1, cp), lambda i: (0, 0)),
            pl.BlockSpec((1, cp), lambda i: (0, 0)),
        ],
        out_specs=pl.BlockSpec((1, ho, wo, cp), lambda i: (i, 0, 0, 0)),
        compiler_params=pltpu.CompilerParams(
            dimension_semantics=("parallel",),
            vmem_limit_bytes=VMEM_LIMIT),
        cost_estimate=pl.CostEstimate(
            flops=int(2 * n * ho * wo * 9 * cp * cp),
            transcendentals=0,
            bytes_accessed=int(xg.size * 2 + w_taps.size * 2
                               + n * ho * wo * cp * 2)),
    )(xg, w_taps, scale, bias)
    return out, ho, wo


# ---------------------------------------------------------------------------
# parameter preparation (BN folding, channel padding to LANE, bf16 weights)
# ---------------------------------------------------------------------------
def fold_bn(gamma, beta, mean, var):
    scale = gamma / jnp.sqrt(var + EPS)
    bias = beta - mean * scale
    return scale, bias


def prepare_params(raw, in_planes, planes, expansion=4):
    out_planes = expansion * planes
    cin_p = _round_up(in_planes, LANE)
    p_p = _round_up(planes, LANE)
    cout_p = _round_up(out_planes, LANE)

    def vec(scale, bias, cp):
        # padded channels get scale=0 / bias=0 so they stay exactly zero
        s = _pad_to(scale.astype(jnp.float32), 0, cp).reshape(1, cp)
        b = _pad_to(bias.astype(jnp.float32), 0, cp).reshape(1, cp)
        return s, b

    c1, c2, c3 = raw["c1"], raw["c2"], raw["c3"]
    w1 = _pad_to(_pad_to(c1[:, :, 0, 0].T, 0, cin_p), 1, p_p).astype(jnp.bfloat16)
    w2 = jnp.stack([c2[:, :, kh, kw].T for kh in range(3) for kw in range(3)], 0)
    w2 = _pad_to(_pad_to(w2, 1, p_p), 2, p_p).astype(jnp.bfloat16)
    w3 = _pad_to(_pad_to(c3[:, :, 0, 0].T, 0, p_p), 1, cout_p).astype(jnp.bfloat16)

    s1, b1 = vec(*fold_bn(*raw["bn1"]), p_p)
    s2, b2 = vec(*fold_bn(*raw["bn2"]), p_p)
    s3, b3 = vec(*fold_bn(*raw["bn3"]), cout_p)

    params = dict(w1=w1, w2=w2, w3=w3, s1=s1, b1=b1, s2=s2, b2=b2,
                  s3=s3, b3=b3, ws=None, ss=None, bs=None,
                  cin_p=cin_p, p_p=p_p, cout_p=cout_p, cout=out_planes)

    if raw.get("cs") is not None:
        ws = _pad_to(_pad_to(raw["cs"][:, :, 0, 0].T, 0, cin_p), 1, cout_p)
        params["ws"] = ws.astype(jnp.bfloat16)
        params["ss"], params["bs"] = vec(*fold_bn(*raw["bns"]), cout_p)
    return params


# ---------------------------------------------------------------------------
# Bottleneck forward (NCHW in / NCHW out, matches the PyTorch module)
# ---------------------------------------------------------------------------
def bottleneck_forward(x_nchw, params, stride):
    # TODO(synk): in a full network keep activations NHWC end-to-end and drop
    #             the per-block NCHW<->NHWC transposes.
    x = jnp.transpose(x_nchw, (0, 2, 3, 1)).astype(jnp.float32)
    n, h, w, _ = x.shape
    cin_p, p_p, cout_p, cout = (params["cin_p"], params["p_p"],
                                params["cout_p"], params["cout"])

    xc = _pad_to(x, 3, cin_p)                       # f32, channel padded
    x_bf = xc.astype(jnp.bfloat16)

    # conv1 (1x1) + bn1 + relu
    out1 = _row_tiled_call(
        functools.partial(_mm_bn_kernel, relu=True),
        [x_bf.reshape(-1, cin_p), params["w1"], params["s1"], params["b1"]],
        ["dot", "full", "full", "full"],
        n * h * w, p_p, jnp.bfloat16)
    out1 = out1.reshape(n, h, w, p_p)

    # conv2 (3x3, stride, pad=1) + bn2 + relu — fused, taps accumulated in-kernel
    out2, ho, wo = conv3x3_bn_relu(out1, params["w2"], params["s2"],
                                   params["b2"], stride)
    out2_rows = out2.reshape(n * ho * wo, p_p)
    m_out = n * ho * wo

    # conv3 (1x1) + bn3 + shortcut + relu — fully fused final stage
    if params["ws"] is not None:
        # TODO(synk): gather the strided shortcut rows via a BlockSpec
        #             index_map instead of this XLA strided slice.
        xs = x_bf[:, ::stride, ::stride, :].reshape(m_out, cin_p)
        out3 = _row_tiled_call(
            _mm_bn_proj_add_relu_kernel,
            [out2_rows, params["w3"], params["s3"], params["b3"],
             xs, params["ws"], params["ss"], params["bs"]],
            ["dot", "full", "full", "full", "dot", "full", "full", "full"],
            m_out, cout_p, jnp.float32)
    else:
        res = xc.reshape(m_out, cout_p)             # identity (cin_p == cout_p)
        out3 = _row_tiled_call(
            _mm_bn_add_relu_kernel,
            [out2_rows, params["w3"], params["s3"], params["b3"], res],
            ["dot", "full", "full", "full", "rows"],
            m_out, cout_p, jnp.float32)

    out = out3.reshape(n, ho, wo, cout_p)[:, :, :, :cout]
    return jnp.transpose(out, (0, 3, 1, 2))


# ---------------------------------------------------------------------------
# pure-JAX reference + deterministic parameter construction
# ---------------------------------------------------------------------------
def reference_forward(x, raw, stride):
    def conv(x, w, s, pad):
        return jax.lax.conv_general_dilated(
            x, w, (s, s), pad, dimension_numbers=("NCHW", "OIHW", "NCHW"))

    def bn(x, g, b, m, v):
        sh = (1, -1, 1, 1)
        return (x - m.reshape(sh)) / jnp.sqrt(v.reshape(sh) + EPS) \
            * g.reshape(sh) + b.reshape(sh)

    out = jax.nn.relu(bn(conv(x, raw["c1"], 1, "VALID"), *raw["bn1"]))
    out = jax.nn.relu(bn(conv(out, raw["c2"], stride, [(1, 1), (1, 1)]), *raw["bn2"]))
    out = bn(conv(out, raw["c3"], 1, "VALID"), *raw["bn3"])
    if raw["cs"] is not None:
        sc = bn(conv(x, raw["cs"], stride, "VALID"), *raw["bns"])
    else:
        sc = x
    return jax.nn.relu(out + sc)


def make_raw_params(key, in_planes, planes, stride, expansion=4):
    out_planes = expansion * planes
    ks = jax.random.split(key, 8)

    def bn_init(k, c):
        k1, k2, k3, k4 = jax.random.split(k, 4)
        return (0.5 + jax.random.uniform(k1, (c,)),
                0.1 * jax.random.normal(k2, (c,)),
                0.1 * jax.random.normal(k3, (c,)),
                0.5 + jax.random.uniform(k4, (c,)))

    raw = {
        "c1": 0.1 * jax.random.normal(ks[0], (planes, in_planes, 1, 1)),
        "c2": 0.1 * jax.random.normal(ks[1], (planes, planes, 3, 3)),
        "c3": 0.1 * jax.random.normal(ks[2], (out_planes, planes, 1, 1)),
        "bn1": bn_init(ks[3], planes),
        "bn2": bn_init(ks[4], planes),
        "bn3": bn_init(ks[5], out_planes),
        "cs": None, "bns": None,
    }
    if stride != 1 or in_planes != out_planes:
        raw["cs"] = 0.1 * jax.random.normal(ks[6], (out_planes, in_planes, 1, 1))
        raw["bns"] = bn_init(ks[7], out_planes)
    return raw


# ---------------------------------------------------------------------------
if __name__ == "__main__":
    key = jax.random.PRNGKey(0)

    # (batch, in_planes, planes, stride, hw): projection- and identity-shortcut
    configs = [(2, 8, 4, 2, 16),
               (2, 16, 4, 1, 16)]

    for i, (batch, in_planes, planes, stride, hw) in enumerate(configs):
        k_x, k_p = jax.random.split(jax.random.fold_in(key, i))
        x = jax.random.normal(k_x, (batch, in_planes, hw, hw), dtype=jnp.float32)
        raw = make_raw_params(k_p, in_planes, planes, stride)
        params = prepare_params(raw, in_planes, planes)

        out = jax.block_until_ready(bottleneck_forward(x, params, stride))
        ref = jax.block_until_ready(reference_forward(x, raw, stride))

        assert out.shape == ref.shape == (batch, 4 * planes,
                                          hw // stride, hw // stride)
        max_err = float(jnp.max(jnp.abs(out - ref)))
        tol = 3e-2 + 2e-2 * float(jnp.max(jnp.abs(ref)))   # bf16 operands
        assert max_err < tol, (i, max_err, tol)

    print("KERNEL_OK")
</pallas_src>

<mosaic_0001>
module attributes {stable_mosaic.version = 11 : i64} {
  func.func @_mm_bn_kernel(%arg0: i32, %arg1: memref<256x128xbf16, #tpu.memory_space<vmem>>, %arg2: memref<128x128xbf16, #tpu.memory_space<vmem>>, %arg3: memref<1x128xf32, #tpu.memory_space<vmem>>, %arg4: memref<1x128xf32, #tpu.memory_space<vmem>>, %arg5: memref<256x128xbf16, #tpu.memory_space<vmem>>) attributes {dimension_semantics = [#tpu.dimension_semantics<parallel>], iteration_bounds = array<i64: 2>, scalar_prefetch = 0 : i64, scratch_operands = 0 : i64, tpu.core_type = #tpu.core_type<tc>, window_params = [{transform_indices = @transform_0, window_bounds = array<i64: 256, 128>}, {pipeline_mode = #tpu.pipeline_mode<synchronous>, transform_indices = @transform_1, window_bounds = array<i64: 128, 128>}, {pipeline_mode = #tpu.pipeline_mode<synchronous>, transform_indices = @transform_2, window_bounds = array<i64: 1, 128>}, {pipeline_mode = #tpu.pipeline_mode<synchronous>, transform_indices = @transform_3, window_bounds = array<i64: 1, 128>}, {transform_indices = @transform_4, window_bounds = array<i64: 256, 128>}]} {
    %c0 = arith.constant 0 : index
    %c0_0 = arith.constant 0 : index
    %0 = vector.load %arg1[%c0, %c0_0] : memref<256x128xbf16, #tpu.memory_space<vmem>>, vector<256x128xbf16>
    %c0_1 = arith.constant 0 : index
    %c0_2 = arith.constant 0 : index
    %1 = vector.load %arg2[%c0_1, %c0_2] : memref<128x128xbf16, #tpu.memory_space<vmem>>, vector<128x128xbf16>
    %cst = arith.constant dense<0.000000e+00> : vector<256x128xf32>
    %2 = tpu.matmul %0, %1, %cst {dimension_numbers = #tpu.dot_dimension_numbers<[1], [0], [0], [1], [0, 0, 1, 1], [], []>} : vector<256x128xbf16>, vector<128x128xbf16>, vector<256x128xf32> -> vector<256x128xf32>
    %c0_3 = arith.constant 0 : index
    %c0_4 = arith.constant 0 : index
    %3 = vector.load %arg3[%c0_3, %c0_4] : memref<1x128xf32, #tpu.memory_space<vmem>>, vector<1x128xf32>
    %4 = vector.broadcast %3 : vector<1x128xf32> to vector<256x128xf32>
    %5 = arith.mulf %2, %4 : vector<256x128xf32>
    %c0_5 = arith.constant 0 : index
    %c0_6 = arith.constant 0 : index
    %6 = vector.load %arg4[%c0_5, %c0_6] : memref<1x128xf32, #tpu.memory_space<vmem>>, vector<1x128xf32>
    %7 = vector.broadcast %6 : vector<1x128xf32> to vector<256x128xf32>
    %8 = arith.addf %5, %7 : vector<256x128xf32>
    %cst_7 = arith.constant 0.000000e+00 : f32
    %9 = vector.broadcast %cst_7 : f32 to vector<256x128xf32>
    %10 = arith.maximumf %8, %9 : vector<256x128xf32>
    %11 = arith.truncf %10 : vector<256x128xf32> to vector<256x128xbf16>
    %c0_8 = arith.constant 0 : index
    %c0_9 = arith.constant 0 : index
    %12 = vector.load %arg5[%c0_8, %c0_9] : memref<256x128xbf16, #tpu.memory_space<vmem>>, vector<256x128xbf16>
    tpu.vector_store %arg5[%c0_8, %c0_9], %11 {strides = array<i32>} : memref<256x128xbf16, #tpu.memory_space<vmem>>, vector<256x128xbf16>,
    return
  }
  func.func @transform_0(%arg0: i32) -> (i32, i32) {
    %c0_i32 = arith.constant 0 : i32
    %c0_i32_0 = arith.constant 0 : i32
    return %arg0, %c0_i32 : i32, i32
  }
  func.func @transform_1(%arg0: i32) -> (i32, i32) {
    %c0_i32 = arith.constant 0 : i32
    %c0_i32_0 = arith.constant 0 : i32
    %c0_i32_1 = arith.constant 0 : i32
    return %c0_i32, %c0_i32_0 : i32, i32
  }
  func.func @transform_2(%arg0: i32) -> (i32, i32) {
    %c0_i32 = arith.constant 0 : i32
    %c0_i32_0 = arith.constant 0 : i32
    %c0_i32_1 = arith.constant 0 : i32
    return %c0_i32, %c0_i32_0 : i32, i32
  }
  func.func @transform_3(%arg0: i32) -> (i32, i32) {
    %c0_i32 = arith.constant 0 : i32
    %c0_i32_0 = arith.constant 0 : i32
    %c0_i32_1 = arith.constant 0 : i32
    return %c0_i32, %c0_i32_0 : i32, i32
  }
  func.func @transform_4(%arg0: i32) -> (i32, i32) {
    %c0_i32 = arith.constant 0 : i32
    %c0_i32_0 = arith.constant 0 : i32
    return %arg0, %c0_i32 : i32, i32
  }
}

</mosaic_0001>

<llo_original>
// kernel: tpu_custom_call.1
$region0: #{tpu_custom_call.1}
  #allocation0 [shape = 'u32[]', space=smem, size = 0x4, offset = 0x4, fixed_abs, tag = 'smem constant byte address 0x4 - core index']
  #allocation1 [shape = 'u32[144,128]{1,0:T(1,128)}', space=vmem, size = 0x12000, scoped, tag = 'internal scratch']
  %s0 = inlined_call_operand.hbm [shape: bf16[512,128], index: 0, kind: input, shape index: {}]
  %s1 = inlined_call_operand.hbm [shape: bf16[128,128], index: 1, kind: input, shape index: {}]
  %s2 = inlined_call_operand.vmem [shape: f32[1,128], index: 2, kind: input, shape index: {}]
  %s3 = inlined_call_operand.vmem [shape: f32[1,128], index: 3, kind: input, shape index: {}]
  %s4 = inlined_call_operand.hbm [shape: bf16[512,128], index: 4, kind: output, shape index: {}]
  %s5 = sld [smem:[#allocation0]]
  $region57: #{tpu_custom_call.1} parent=0
    _
  %s7 = ssub.s32 1, %s5
  %s8 = scalar_select 0, %s7, %s5
  $region1: #{tpu_custom_call.1} parent=0
    #allocation2 [shape = 'u8[131072]{0}', space=vmem, size = 0x20000, scoped, tag = 'input window, operand 0']
    #allocation3 [shape = 's32[2]{0}', space=sflag, size = 0x8, scoped, tag = 'scoped memory for tpu_custom_call.1']
    #allocation4 [shape = 's32[2]{0}', space=sflag, size = 0x8, scoped, tag = 'scoped memory for tpu_custom_call.1']
    #allocation5 [shape = 'u8[32768]{0}', space=vmem, size = 0x8000, scoped, tag = 'input window, operand 1, single buffered']
    #allocation6 [shape = 's32[1]{0}', space=sflag, size = 0x4, scoped, tag = 'scoped memory for tpu_custom_call.1']
    #allocation7 [shape = 'u8[131072]{0}', space=vmem, size = 0x20000, scoped, tag = 'output window, operand 0']
    %9 = vsyncpa [#allocation3], 0
    %s10 = scalar_lea.sflag [#allocation3], 1
    %11 = vsyncpa %s10, 0
    %12 = vsyncpa [#allocation6], 0
    %13 = vsyncpa [#allocation4], 0
    %s14 = scalar_lea.sflag [#allocation4], 1
    %15 = vsyncpa %s14, 0
    loop: start=0, step=1, limit=4
    $region2: #{tpu_custom_call.1} parent=1 // loop_pre_header
      _
    $region3: #{tpu_custom_call.1} parent=1 // loop_header
      %s17 = sphi 0, %s21
      %p18 = scmp.ge.s32.totalorder %s17, 4
      %s27 = sphi 0, %s29
      %s30 = sphi 0, %s27
      %s31 = sphi 0, %s30
      %s47 = sphi 0, %s31
      %s51 = sphi 0, %s51
      %s53 = sphi 0, %s51
      %s54 = sphi 0, %s53
      %s68 = sphi 0, %s54
      %s72 = sphi 0, %s72
      %s74 = sphi 0, %s72
      %s75 = sphi 0, %s74
      %s89 = sphi 0, %s75
      %s93 = sphi 0, %s93
      %s95 = sphi 0, %s93
      %s96 = sphi 0, %s95
      %s110 = sphi 0, %s96
      %s116 = sphi 0, %s118
      %s119 = sphi 0, %s116
      %s120 = sphi 0, %s119
      %s136 = sphi 0, %s120
    $region4: #{tpu_custom_call.1} parent=1 // loop_header_branch
      %20 = sbr.rel (%p18) target = $region8
    $region5: #{tpu_custom_call.1} parent=1 // loop_body
      %s22 = ssub.s32 %s17, 1
      %s23 = ssub.s32 %s17, 2
      %s24 = sadd.s32 %s17, 1
      %s25 = ssub.s32 %s17, %s24
      %p26 = scmp.eq.s32.totalorder %s25, 0
      %s28 = sadd.s32 %s27, 1
      %s29 = scalar_select %p26, %s27, %s28
      %p32 = pneg %p26
      %p33 = scmp.eq.s32.totalorder %s17, 1
      %p34 = por %p32, %p33
      %p35 = scmp.ne.s32.totalorder %s27, %s30
      %p36 = scmp.eq.s32.totalorder %s17, 0
      %p37 = por %p35, %p36
      %p38 = scmp.ne.s32.totalorder %s27, %s30
      %p39 = scmp.eq.s32.totalorder %s22, 1
      %p40 = por %p38, %p39
      %p41 = scmp.ne.s32.totalorder %s30, %s31
      %p42 = scmp.eq.s32.totalorder %s22, 0
      %p43 = por %p41, %p42
      %p44 = scmp.ne.s32.totalorder %s30, %s31
      %p45 = scmp.eq.s32.totalorder %s23, 1
      %p46 = por %p44, %p45
      %p48 = scmp.ne.s32.totalorder %s31, %s47
      %p49 = scmp.eq.s32.totalorder %s23, 0
      %p50 = por %p48, %p49
      %s52 = sadd.s32 %s51, 1
      %p55 = scmp.eq.s32.totalorder %s17, 1
      %p56 = scmp.ne.s32.totalorder %s51, %s53
      %p57 = scmp.eq.s32.totalorder %s17, 0
      %p58 = por %p56, %p57
      %p59 = scmp.ne.s32.totalorder %s51, %s53
      %p60 = scmp.eq.s32.totalorder %s22, 1
      %p61 = por %p59, %p60
      %p62 = scmp.ne.s32.totalorder %s53, %s54
      %p63 = scmp.eq.s32.totalorder %s22, 0
      %p64 = por %p62, %p63
      %p65 = scmp.ne.s32.totalorder %s53, %s54
      %p66 = scmp.eq.s32.totalorder %s23, 1
      %p67 = por %p65, %p66
      %p69 = scmp.ne.s32.totalorder %s54, %s68
      %p70 = scmp.eq.s32.totalorder %s23, 0
      %p71 = por %p69, %p70
      %s73 = sadd.s32 %s72, 1
      %p76 = scmp.eq.s32.totalorder %s17, 1
      %p77 = scmp.ne.s32.totalorder %s72, %s74
      %p78 = scmp.eq.s32.totalorder %s17, 0
      %p79 = por %p77, %p78
      %p80 = scmp.ne.s32.totalorder %s72, %s74
      %p81 = scmp.eq.s32.totalorder %s22, 1
      %p82 = por %p80, %p81
      %p83 = scmp.ne.s32.totalorder %s74, %s75
      %p84 = scmp.eq.s32.totalorder %s22, 0
      %p85 = por %p83, %p84
      %p86 = scmp.ne.s32.totalorder %s74, %s75
      %p87 = scmp.eq.s32.totalorder %s23, 1
      %p88 = por %p86, %p87
      %p90 = scmp.ne.s32.totalorder %s75, %s89
      %p91 = scmp.eq.s32.totalorder %s23, 0
      %p92 = por %p90, %p91
      %s94 = sadd.s32 %s93, 1
      %p97 = scmp.eq.s32.totalorder %s17, 1
      %p98 = scmp.ne.s32.totalorder %s93, %s95
      %p99 = scmp.eq.s32.totalorder %s17, 0
      %p100 = por %p98, %p99
      %p101 = scmp.ne.s32.totalorder %s93, %s95
      %p102 = scmp.eq.s32.totalorder %s22, 1
      %p103 = por %p101, %p102
      %p104 = scmp.ne.s32.totalorder %s95, %s96
      %p105 = scmp.eq.s32.totalorder %s22, 0
      %p106 = por %p104, %p105
      %p107 = scmp.ne.s32.totalorder %s95, %s96
      %p108 = scmp.eq.s32.totalorder %s23, 1
      %p109 = por %p107, %p108
      %p111 = scmp.ne.s32.totalorder %s96, %s110
      %p112 = scmp.eq.s32.totalorder %s23, 0
      %p113 = por %p111, %p112
      %s114 = ssub.s32 %s17, %s24
      %p115 = scmp.eq.s32.totalorder %s114, 0
      %s117 = sadd.s32 %s116, 1
      %s118 = scalar_select %p115, %s116, %s117
      %p121 = pneg %p115
      %p122 = scmp.eq.s32.totalorder %s17, 1
      %p123 = por %p121, %p122
      %p124 = scmp.ne.s32.totalorder %s116, %s119
      %p125 = scmp.eq.s32.totalorder %s17, 0
      %p126 = por %p124, %p125
      %p127 = scmp.ne.s32.totalorder %s116, %s119
      %p128 = scmp.eq.s32.totalorder %s22, 1
      %p129 = por %p127, %p128
      %p130 = scmp.ne.s32.totalorder %s119, %s120
      %p131 = scmp.eq.s32.totalorder %s22, 0
      %p132 = por %p130, %p131
      %p133 = scmp.ne.s32.totalorder %s119, %s120
      %p134 = scmp.eq.s32.totalorder %s23, 1
      %p135 = por %p133, %p134
      %p137 = scmp.ne.s32.totalorder %s120, %s136
      %p138 = scmp.eq.s32.totalorder %s23, 0
      %p139 = por %p137, %p138
      %p140 = scmp.le.s32.totalorder 1, %s17
      %p141 = scmp.lt.s32.totalorder %s17, 3
      %p142 = pnand %p140, %p141
      %p143 = pneg %p142
      // Predicated region
      $region9: #{tpu_custom_call.1} parent=5 // pred_check
        _
      $region10: #{tpu_custom_call.1} parent=5 // pred_check_branch
        %145 = sbr.rel (%p142) target = $region12
      $region11: #{tpu_custom_call.1} parent=5 // pred_region
        %s146 = ssub.s32 %s17, 1
        // Predicated region
        $region13: #{tpu_custom_call.1} parent=11 // pred_check
          %p147 = pneg %p64
        $region14: #{tpu_custom_call.1} parent=11 // pred_check_branch
          %149 = sbr.rel (%p147) target = $region16
        $region15: #{tpu_custom_call.1} parent=11 // pred_region
          %s151 = ssub.s32 1024, 1024
          %152 = vsyncadd [#allocation6], %s151
          %s153 = sshll.u32 [#allocation5], 4
          %s154 = int_to_ptr.vmem [resolvable:$true] %s153
          %159 = dma.hbm_to_vmem [thread:$0]  %s1, 1024, %s154, [#allocation6], 64, 64, 4
        $region16: #{tpu_custom_call.1} parent=11 // pred_fallthru
          _
        // Predicated region
        $region17: #{tpu_custom_call.1} parent=11 // pred_check
          %p160 = pneg %p85
        $region18: #{tpu_custom_call.1} parent=11 // pred_check_branch
          %162 = sbr.rel (%p160) target = $region20
        $region19: #{tpu_custom_call.1} parent=11 // pred_region
          _
        $region20: #{tpu_custom_call.1} parent=11 // pred_fallthru
          _
        // Predicated region
        $region21: #{tpu_custom_call.1} parent=11 // pred_check
          %p163 = pneg %p106
        $region22: #{tpu_custom_call.1} parent=11 // pred_check_branch
          %165 = sbr.rel (%p163) target = $region24
        $region23: #{tpu_custom_call.1} parent=11 // pred_region
          _
        $region24: #{tpu_custom_call.1} parent=11 // pred_fallthru
          _
      $region12: #{tpu_custom_call.1} parent=5 // pred_fallthru
        _
      %p166 = scmp.lt.s32.totalorder %s17, 2
      // Predicated region
      $region25: #{tpu_custom_call.1} parent=5 // pred_check
        %p167 = pneg %p166
      $region26: #{tpu_custom_call.1} parent=5 // pred_check_branch
        %169 = sbr.rel (%p167) target = $region28
      $region27: #{tpu_custom_call.1} parent=5 // pred_region
        // Predicated region
        $region29: #{tpu_custom_call.1} parent=27 // pred_check
          %p170 = pneg %p37
        $region30: #{tpu_custom_call.1} parent=27 // pred_check_branch
          %172 = sbr.rel (%p170) target = $region32
        $region31: #{tpu_custom_call.1} parent=27 // pred_region
          %s173 = sand.u32 %s27, 1
          %s174 = scalar_lea.sflag [#allocation3], %s173
          %s175 = sand.u32 %s27, 1
          %s176 = smul.addr %s175, 128
          %s177 = scalar_lea.vmem [#allocation2], %s176
          %s178 = smul.u32 32, %s17
          %s180 = ssub.s32 2048, 2048
          %181 = vsyncadd %s174, %s180
          %s182 = smul.addr %s178, 64
          %s183 = scalar_lea.hbm %s0, %s182
          %s184 = sshll.u32 %s177, 4
          %s185 = int_to_ptr.vmem [resolvable:$true] %s184
          %190 = dma.hbm_to_vmem [thread:$0]  %s183, 2048, %s185, %s174, 64, 64, 4
        $region32: #{tpu_custom_call.1} parent=27 // pred_fallthru
          _
      $region28: #{tpu_custom_call.1} parent=5 // pred_fallthru
        _
      %p191 = scmp.le.s32.totalorder 1, %s17
      %p192 = scmp.lt.s32.totalorder %s17, 3
      %p193 = pnand %p191, %p192
      %p194 = pneg %p193
      // Predicated region
      $region33: #{tpu_custom_call.1} parent=5 // pred_check
        _
      $region34: #{tpu_custom_call.1} parent=5 // pred_check_branch
        %196 = sbr.rel (%p193) target = $region36
      $region35: #{tpu_custom_call.1} parent=5 // pred_region
        %s197 = ssub.s32 %s17, 1
        %s198 = sand.u32 %s30, 1
        %s199 = scalar_lea.sflag [#allocation3], %s198
        %s200 = sand.u32 %s30, 1
        %s201 = smul.addr %s200, 128
        %s202 = scalar_lea.vmem [#allocation2], %s201
        // Predicated region
        $region37: #{tpu_custom_call.1} parent=35 // pred_check
          %p203 = pneg %p43
        $region38: #{tpu_custom_call.1} parent=35 // pred_check_branch
          %205 = sbr.rel (%p203) target = $region40
        $region39: #{tpu_custom_call.1} parent=35 // pred_region
          %206 = dma.done %s199, 2048
        $region40: #{tpu_custom_call.1} parent=35 // pred_fallthru
          _
        // Predicated region
        $region41: #{tpu_custom_call.1} parent=35 // pred_check
          %p207 = pneg %p64
        $region42: #{tpu_custom_call.1} parent=35 // pred_check_branch
          %209 = sbr.rel (%p207) target = $region44
        $region43: #{tpu_custom_call.1} parent=35 // pred_region
          %210 = dma.done [#allocation6], 1024
        $region44: #{tpu_custom_call.1} parent=35 // pred_fallthru
          _
        %s211 = sand.u32 %s30, 1
        %s212 = scalar_lea.sflag [#allocation3], %s211
        %s213 = sand.u32 %s30, 1
        %s214 = smul.addr %s213, 128
        %s215 = scalar_lea.vmem [#allocation2], %s214
        %p216 = pneg %p43
        %p217 = pneg %p40
        %p218 = pneg %p64
        %p219 = pneg %p61
        %p220 = pneg %p85
        %p221 = pneg %p82
        %p222 = pneg %p106
        %p223 = pneg %p103
        %p224 = pneg %p132
        %p225 = pneg %p129
        %s226 = sand.u32 %s119, 1
        %s227 = scalar_lea.sflag [#allocation4], %s226
        %s228 = sand.u32 %s119, 1
        %s229 = smul.addr %s228, 128
        %s230 = scalar_lea.vmem [#allocation7], %s229
        %s231 = smul.u32 32, %s22
        %s232 = smul.u32 32, %s22
        %v234 = vld [vmem:[%s202] sm:$0xf]
        %v235 = vld [vmem:[%s202 + $0x4] sm:$0xf]
        %v236 = vld [vmem:[%s202 + $0x8] sm:$0xf]
        %v237 = vld [vmem:[%s202 + $0xc] sm:$0xf]
        %v238 = vld [vmem:[%s202 + $0x10] sm:$0xf]
        %v239 = vld [vmem:[%s202 + $0x14] sm:$0xf]
        %v240 = vld [vmem:[%s202 + $0x18] sm:$0xf]
        %v241 = vld [vmem:[%s202 + $0x1c] sm:$0xf]
        %v242 = vld [vmem:[%s202 + $0x20] sm:$0xf]
        %v243 = vld [vmem:[%s202 + $0x24] sm:$0xf]
        %v244 = vld [vmem:[%s202 + $0x28] sm:$0xf]
        %v245 = vld [vmem:[%s202 + $0x2c] sm:$0xf]
        %v246 = vld [vmem:[%s202 + $0x30] sm:$0xf]
        %v247 = vld [vmem:[%s202 + $0x34] sm:$0xf]
        %v248 = vld [vmem:[%s202 + $0x38] sm:$0xf]
        %v249 = vld [vmem:[%s202 + $0x3c] sm:$0xf]
        %v250 = vld [vmem:[%s202 + $0x40] sm:$0xf]
        %v251 = vld [vmem:[%s202 + $0x44] sm:$0xf]
        %v252 = vld [vmem:[%s202 + $0x48] sm:$0xf]
        %v253 = vld [vmem:[%s202 + $0x4c] sm:$0xf]
        %v254 = vld [vmem:[%s202 + $0x50] sm:$0xf]
        %v255 = vld [vmem:[%s202 + $0x54] sm:$0xf]
        %v256 = vld [vmem:[%s202 + $0x58] sm:$0xf]
        %v257 = vld [vmem:[%s202 + $0x5c] sm:$0xf]
        %v258 = vld [vmem:[%s202 + $0x60] sm:$0xf]
        %v259 = vld [vmem:[%s202 + $0x64] sm:$0xf]
        %v260 = vld [vmem:[%s202 + $0x68] sm:$0xf]
        %v261 = vld [vmem:[%s202 + $0x6c] sm:$0xf]
        %v262 = vld [vmem:[%s202 + $0x70] sm:$0xf]
        %v263 = vld [vmem:[%s202 + $0x74] sm:$0xf]
        %v264 = vld [vmem:[%s202 + $0x78] sm:$0xf]
        %v265 = vld [vmem:[%s202 + $0x7c] sm:$0xf]
        %v266 = vld [vmem:[#allocation5] sm:$0xf]
        %v267 = vld [vmem:[#allocation5 + $0x4] sm:$0xf]
        %v268 = vld [vmem:[#allocation5 + $0x8] sm:$0xf]
        %v269 = vld [vmem:[#allocation5 + $0xc] sm:$0xf]
        %v270 = vld [vmem:[#allocation5 + $0x10] sm:$0xf]
        %v271 = vld [vmem:[#allocation5 + $0x14] sm:$0xf]
        %v272 = vld [vmem:[#allocation5 + $0x18] sm:$0xf]
        %v273 = vld [vmem:[#allocation5 + $0x1c] sm:$0xf]
        %v274 = vld [vmem:[#allocation5 + $0x20] sm:$0xf]
        %v275 = vld [vmem:[#allocation5 + $0x24] sm:$0xf]
        %v276 = vld [vmem:[#allocation5 + $0x28] sm:$0xf]
        %v277 = vld [vmem:[#allocation5 + $0x2c] sm:$0xf]
        %v278 = vld [vmem:[#allocation5 + $0x30] sm:$0xf]
        %v279 = vld [vmem:[#allocation5 + $0x34] sm:$0xf]
        %v280 = vld [vmem:[#allocation5 + $0x38] sm:$0xf]
        %v281 = vld [vmem:[#allocation5 + $0x3c] sm:$0xf]
        %v314 = vunpack.c.l.b16 %v234
        %v315 = vunpack.c.l.b16 %v235
        %v316 = vunpack.c.l.b16 %v236
        %v317 = vunpack.c.l.b16 %v237
        %v318 = vunpack.c.l.b16 %v238
        %v319 = vunpack.c.l.b16 %v239
        %v320 = vunpack.c.l.b16 %v240
        %v321 = vunpack.c.l.b16 %v241
        %v322 = vunpack.c.l.b16 %v242
        %v323 = vunpack.c.l.b16 %v243
        %v324 = vunpack.c.l.b16 %v244
        %v325 = vunpack.c.l.b16 %v245
        %v326 = vunpack.c.l.b16 %v246
        %v327 = vunpack.c.l.b16 %v247
        %v328 = vunpack.c.l.b16 %v248
        %v329 = vunpack.c.l.b16 %v249
        %v330 = vunpack.c.l.b16 %v250
        %v331 = vunpack.c.l.b16 %v251
        %v332 = vunpack.c.l.b16 %v252
        %v333 = vunpack.c.l.b16 %v253
        %v334 = vunpack.c.l.b16 %v254
        %v335 = vunpack.c.l.b16 %v255
        %v336 = vunpack.c.l.b16 %v256
        %v337 = vunpack.c.l.b16 %v257
        %v338 = vunpack.c.l.b16 %v258
        %v339 = vunpack.c.l.b16 %v259
        %v340 = vunpack.c.l.b16 %v260
        %v341 = vunpack.c.l.b16 %v261
        %v342 = vunpack.c.l.b16 %v262
        %v343 = vunpack.c.l.b16 %v263
        %v344 = vunpack.c.l.b16 %v264
        %v345 = vunpack.c.l.b16 %v265
        %v346 = vpack.c.b16 %v315, %v314
        %v347 = vpack.c.b16 %v317, %v316
        %v348 = vpack.c.b16 %v319, %v318
        %v349 = vpack.c.b16 %v321, %v320
        %v350 = vpack.c.b16 %v323, %v322
        %v351 = vpack.c.b16 %v325, %v324
        %v352 = vpack.c.b16 %v327, %v326
        %v353 = vpack.c.b16 %v329, %v328
        %v354 = vpack.c.b16 %v331, %v330
        %v355 = vpack.c.b16 %v333, %v332
        %v356 = vpack.c.b16 %v335, %v334
        %v357 = vpack.c.b16 %v337, %v336
        %v358 = vpack.c.b16 %v339, %v338
        %v359 = vpack.c.b16 %v341, %v340
        %v360 = vpack.c.b16 %v343, %v342
        %v361 = vpack.c.b16 %v345, %v344
        %v394 = vunpack.c.l.b16 %v266
        %v395 = vunpack.c.l.b16 %v267
        %v396 = vunpack.c.l.b16 %v268
        %v397 = vunpack.c.l.b16 %v269
        %v398 = vunpack.c.l.b16 %v270
        %v399 = vunpack.c.l.b16 %v271
        %v400 = vunpack.c.l.b16 %v272
        %v401 = vunpack.c.l.b16 %v273
        %v402 = vunpack.c.l.b16 %v274
        %v403 = vunpack.c.l.b16 %v275
        %v404 = vunpack.c.l.b16 %v276
        %v405 = vunpack.c.l.b16 %v277
        %v406 = vunpack.c.l.b16 %v278
        %v407 = vunpack.c.l.b16 %v279
        %v408 = vunpack.c.l.b16 %v280
        %v409 = vunpack.c.l.b16 %v281
        %v410 = vpack.c.b16 %v395, %v394
        %v411 = vpack.c.b16 %v397, %v396
        %v412 = vpack.c.b16 %v399, %v398
        %v413 = vpack.c.b16 %v401, %v400
        %v414 = vpack.c.b16 %v403, %v402
        %v415 = vpack.c.b16 %v405, %v404
        %v416 = vpack.c.b16 %v407, %v406
        %v417 = vpack.c.b16 %v409, %v408
        %426 = vmatprep.subr.bf16.mxu0 0
        %427 = vmatpush1.bf16.msra.mxu0 %v417
        %428 = vmatprep.subr.bf16.mxu0 0
        %429 = vmatpush1.bf16.msra.mxu0 %v416
        %430 = vmatprep.subr.bf16.mxu0 0
        %431 = vmatpush1.bf16.msra.mxu0 %v415
        %432 = vmatprep.subr.bf16.mxu0 0
        %433 = vmatpush1.bf16.msra.mxu0 %v414
        %434 = vmatprep.subr.bf16.mxu0 0
        %435 = vmatpush1.bf16.msra.mxu0 %v413
        %436 = vmatprep.subr.bf16.mxu0 0
        %437 = vmatpush1.bf16.msra.mxu0 %v412
        %438 = vmatprep.subr.bf16.mxu0 0
        %439 = vmatpush1.bf16.msra.mxu0 %v411
        %440 = vmatprep.subr.bf16.mxu0 0
        %441 = vmatpush1.bf16.msra.mxu0 %v410
        %442 = vmatprep.subr.bf16.mxu0 0
        %443 = vmatpush2.bf16.msra.mxu0 0
        %444 = vmatprep.subr.bf16.mxu0 0
        %445 = vmatpush2.bf16.msra.mxu0 0
        %446 = vmatprep.subr.bf16.mxu0 0
        %447 = vmatpush2.bf16.msra.mxu0 0
        %448 = vmatprep.subr.bf16.mxu0 0
        %449 = vmatpush2.bf16.msra.mxu0 0
        %450 = vmatprep.subr.bf16.mxu0 0
        %451 = vmatpush2.bf16.msra.mxu0 0
        %452 = vmatprep.subr.bf16.mxu0 0
        %453 = vmatpush2.bf16.msra.mxu0 0
        %454 = vmatprep.subr.bf16.mxu0 0
        %455 = vmatpush2.bf16.msra.mxu0 0
        %456 = vmatprep.subr.bf16.mxu0 0
        %457 = vmatpush2.bf16.msra.mxu0 0
        %458 = vmatprep.mubr.bf16.mxu0 0
        %459 = vmatmul.mubr.bf16.gmra.mxu0 %v346
        %v460 = vpop.f32.mrf.mxu0
        %v461 = vadd.f32 0.0, %v460
        %v462 = vpop.f32.mrf.mxu0
        %v463 = vpop.f32.mrf.mxu0
        %v464 = vadd.f32 0.0, %v463
        %v465 = vpop.f32.mrf.mxu0
        %466 = vmatprep.mubr.bf16.mxu0 0
        %467 = vmatmul.mubr.bf16.gmra.mxu0 %v347
        %v468 = vpop.f32.mrf.mxu0
        %v469 = vadd.f32 0.0, %v468
        %v470 = vpop.f32.mrf.mxu0
        %v471 = vpop.f32.mrf.mxu0
        %v472 = vadd.f32 0.0, %v471
        %v473 = vpop.f32.mrf.mxu0
        %474 = vmatprep.mubr.bf16.mxu0 0
        %475 = vmatmul.mubr.bf16.gmra.mxu0 %v348
        %v476 = vpop.f32.mrf.mxu0
        %v477 = vadd.f32 0.0, %v476
        %v478 = vpop.f32.mrf.mxu0
        %v479 = vpop.f32.mrf.mxu0
        %v480 = vadd.f32 0.0, %v479
        %v481 = vpop.f32.mrf.mxu0
        %482 = vmatprep.mubr.bf16.mxu0 0
        %483 = vmatmul.mubr.bf16.gmra.mxu0 %v349
        %v484 = vpop.f32.mrf.mxu0
        %v485 = vadd.f32 0.0, %v484
        %v486 = vpop.f32.mrf.mxu0
        %v487 = vpop.f32.mrf.mxu0
        %v488 = vadd.f32 0.0, %v487
        %v489 = vpop.f32.mrf.mxu0
        %490 = vmatprep.mubr.bf16.mxu0 0
        %491 = vmatmul.mubr.bf16.gmra.mxu0 %v350
        %v492 = vpop.f32.mrf.mxu0
        %v493 = vadd.f32 0.0, %v492
        %v494 = vpop.f32.mrf.mxu0
        %v495 = vpop.f32.mrf.mxu0
        %v496 = vadd.f32 0.0, %v495
        %v497 = vpop.f32.mrf.mxu0
        %498 = vmatprep.mubr.bf16.mxu0 0
        %499 = vmatmul.mubr.bf16.gmra.mxu0 %v351
        %v500 = vpop.f32.mrf.mxu0
        %v501 = vadd.f32 0.0, %v500
        %v502 = vpop.f32.mrf.mxu0
        %v503 = vpop.f32.mrf.mxu0
        %v504 = vadd.f32 0.0, %v503
        %v505 = vpop.f32.mrf.mxu0
        %506 = vmatprep.mubr.bf16.mxu0 0
        %507 = vmatmul.mubr.bf16.gmra.mxu0 %v352
        %v508 = vpop.f32.mrf.mxu0
        %v509 = vadd.f32 0.0, %v508
        %v510 = vpop.f32.mrf.mxu0
        %v511 = vpop.f32.mrf.mxu0
        %v512 = vadd.f32 0.0, %v511
        %v513 = vpop.f32.mrf.mxu0
        %514 = vmatprep.mubr.bf16.mxu0 0
        %515 = vmatmul.mubr.bf16.gmra.mxu0 %v353
        %v516 = vpop.f32.mrf.mxu0
        %v517 = vadd.f32 0.0, %v516
        %v518 = vpop.f32.mrf.mxu0
        %v519 = vpop.f32.mrf.mxu0
        %v520 = vadd.f32 0.0, %v519
        %v521 = vpop.f32.mrf.mxu0
        %522 = vmatprep.mubr.bf16.mxu0 0
        %523 = vmatmul.mubr.bf16.gmra.mxu0 %v354
        %v524 = vpop.f32.mrf.mxu0
        %v525 = vadd.f32 0.0, %v524
        %v526 = vpop.f32.mrf.mxu0
        %v527 = vpop.f32.mrf.mxu0
        %v528 = vadd.f32 0.0, %v527
        %v529 = vpop.f32.mrf.mxu0
        %530 = vmatprep.mubr.bf16.mxu0 0
        %531 = vmatmul.mubr.bf16.gmra.mxu0 %v355
        %v532 = vpop.f32.mrf.mxu0
        %v533 = vadd.f32 0.0, %v532
        %v534 = vpop.f32.mrf.mxu0
        %v535 = vpop.f32.mrf.mxu0
        %v536 = vadd.f32 0.0, %v535
        %v537 = vpop.f32.mrf.mxu0
        %538 = vmatprep.mubr.bf16.mxu0 0
        %539 = vmatmul.mubr.bf16.gmra.mxu0 %v356
        %v540 = vpop.f32.mrf.mxu0
        %v541 = vadd.f32 0.0, %v540
        %v542 = vpop.f32.mrf.mxu0
        %v543 = vpop.f32.mrf.mxu0
        %v544 = vadd.f32 0.0, %v543
        %v545 = vpop.f32.mrf.mxu0
        %546 = vmatprep.mubr.bf16.mxu0 0
        %547 = vmatmul.mubr.bf16.gmra.mxu0 %v357
        %v548 = vpop.f32.mrf.mxu0
        %v549 = vadd.f32 0.0, %v548
        %v550 = vpop.f32.mrf.mxu0
        %v551 = vpop.f32.mrf.mxu0
        %v552 = vadd.f32 0.0, %v551
        %v553 = vpop.f32.mrf.mxu0
        %554 = vmatprep.mubr.bf16.mxu0 0
        %555 = vmatmul.mubr.bf16.gmra.mxu0 %v358
        %v556 = vpop.f32.mrf.mxu0
        %v557 = vadd.f32 0.0, %v556
        %v558 = vpop.f32.mrf.mxu0
        %v559 = vpop.f32.mrf.mxu0
        %v560 = vadd.f32 0.0, %v559
        %v561 = vpop.f32.mrf.mxu0
        %562 = vmatprep.mubr.bf16.mxu0 0
        %563 = vmatmul.mubr.bf16.gmra.mxu0 %v359
        %v564 = vpop.f32.mrf.mxu0
        %v565 = vadd.f32 0.0, %v564
        %v566 = vpop.f32.mrf.mxu0
        %v567 = vpop.f32.mrf.mxu0
        %v568 = vadd.f32 0.0, %v567
        %v569 = vpop.f32.mrf.mxu0
        %570 = vmatprep.mubr.bf16.mxu0 0
        %571 = vmatmul.mubr.bf16.gmra.mxu0 %v360
        %v572 = vpop.f32.mrf.mxu0
        %v573 = vadd.f32 0.0, %v572
        %v574 = vpop.f32.mrf.mxu0
        %v575 = vpop.f32.mrf.mxu0
        %v576 = vadd.f32 0.0, %v575
        %v577 = vpop.f32.mrf.mxu0
        %578 = vmatprep.mubr.bf16.mxu0 0
        %579 = vmatmul.mubr.bf16.gmra.mxu0 %v361
        %v580 = vpop.f32.mrf.mxu0
        %v581 = vadd.f32 0.0, %v580
        %v582 = vpop.f32.mrf.mxu0
        %v583 = vpop.f32.mrf.mxu0
        %v584 = vadd.f32 0.0, %v583
        %v585 = vpop.f32.mrf.mxu0
        %586 = vdwg.mxu0
        %v587 = vld [vmem:[%s2] sm:$0x1]
        %v589 = vlaneseq
        %v590 = vshrl.u32 %v589, 7
        %v591 = vsub.s32 0, %v590
        %v592 = vrot.slane %v587, %v591
        %v594 = vmul.f32 %v461, %v592
        %v595 = vmul.f32 %v464, %v592
        %v596 = vmul.f32 %v469, %v592
        %v597 = vmul.f32 %v472, %v592
        %v598 = vmul.f32 %v477, %v592
        %v599 = vmul.f32 %v480, %v592
        %v600 = vmul.f32 %v485, %v592
        %v601 = vmul.f32 %v488, %v592
        %v602 = vmul.f32 %v493, %v592
        %v603 = vmul.f32 %v496, %v592
        %v604 = vmul.f32 %v501, %v592
        %v605 = vmul.f32 %v504, %v592
        %v606 = vmul.f32 %v509, %v592
        %v607 = vmul.f32 %v512, %v592
        %v608 = vmul.f32 %v517, %v592
        %v609 = vmul.f32 %v520, %v592
        %v610 = vmul.f32 %v525, %v592
        %v611 = vmul.f32 %v528, %v592
        %v612 = vmul.f32 %v533, %v592
        %v613 = vmul.f32 %v536, %v592
        %v614 = vmul.f32 %v541, %v592
        %v615 = vmul.f32 %v544, %v592
        %v616 = vmul.f32 %v549, %v592
        %v617 = vmul.f32 %v552, %v592
        %v618 = vmul.f32 %v557, %v592
        %v619 = vmul.f32 %v560, %v592
        %v620 = vmul.f32 %v565, %v592
        %v621 = vmul.f32 %v568, %v592
        %v622 = vmul.f32 %v573, %v592
        %v623 = vmul.f32 %v576, %v592
        %v624 = vmul.f32 %v581, %v592
        %v625 = vmul.f32 %v584, %v592
        %v626 = vld [vmem:[%s3] sm:$0x1]
        %v628 = vlaneseq
        %v629 = vshrl.u32 %v628, 7
        %v630 = vsub.s32 0, %v629
        %v631 = vrot.slane %v626, %v630
        %v633 = vadd.f32 %v594, %v631
        %v634 = vadd.f32 %v595, %v631
        %v635 = vadd.f32 %v596, %v631
        %v636 = vadd.f32 %v597, %v631
        %v637 = vadd.f32 %v598, %v631
        %v638 = vadd.f32 %v599, %v631
        %v639 = vadd.f32 %v600, %v631
        %v640 = vadd.f32 %v601, %v631
        %v641 = vadd.f32 %v602, %v631
        %v642 = vadd.f32 %v603, %v631
        %v643 = vadd.f32 %v604, %v631
        %v644 = vadd.f32 %v605, %v631
        %v645 = vadd.f32 %v606, %v631
        %v646 = vadd.f32 %v607, %v631
        %v647 = vadd.f32 %v608, %v631
        %v648 = vadd.f32 %v609, %v631
        %v649 = vadd.f32 %v610, %v631
        %v650 = vadd.f32 %v611, %v631
        %v651 = vadd.f32 %v612, %v631
        %v652 = vadd.f32 %v613, %v631
        %v653 = vadd.f32 %v614, %v631
        %v654 = vadd.f32 %v615, %v631
        %v655 = vadd.f32 %v616, %v631
        %v656 = vadd.f32 %v617, %v631
        %v657 = vadd.f32 %v618, %v631
        %v658 = vadd.f32 %v619, %v631
        %v659 = vadd.f32 %v620, %v631
        %v660 = vadd.f32 %v621, %v631
        %v661 = vadd.f32 %v622, %v631
        %v662 = vadd.f32 %v623, %v631
        %v663 = vadd.f32 %v624, %v631
        %v664 = vadd.f32 %v625, %v631
        %v665 = vmax.f32 %v633, 0.0
        %v666 = vmax.f32 %v634, 0.0
        %v667 = vmax.f32 %v635, 0.0
        %v668 = vmax.f32 %v636, 0.0
        %v669 = vmax.f32 %v637, 0.0
        %v670 = vmax.f32 %v638, 0.0
        %v671 = vmax.f32 %v639, 0.0
        %v672 = vmax.f32 %v640, 0.0
        %v673 = vmax.f32 %v641, 0.0
        %v674 = vmax.f32 %v642, 0.0
        %v675 = vmax.f32 %v643, 0.0
        %v676 = vmax.f32 %v644, 0.0
        %v677 = vmax.f32 %v645, 0.0
        %v678 = vmax.f32 %v646, 0.0
        %v679 = vmax.f32 %v647, 0.0
        %v680 = vmax.f32 %v648, 0.0
        %v681 = vmax.f32 %v649, 0.0
        %v682 = vmax.f32 %v650, 0.0
        %v683 = vmax.f32 %v651, 0.0
        %v684 = vmax.f32 %v652, 0.0
        %v685 = vmax.f32 %v653, 0.0
        %v686 = vmax.f32 %v654, 0.0
        %v687 = vmax.f32 %v655, 0.0
        %v688 = vmax.f32 %v656, 0.0
        %v689 = vmax.f32 %v657, 0.0
        %v690 = vmax.f32 %v658, 0.0
        %v691 = vmax.f32 %v659, 0.0
        %v692 = vmax.f32 %v660, 0.0
        %v693 = vmax.f32 %v661, 0.0
        %v694 = vmax.f32 %v662, 0.0
        %v695 = vmax.f32 %v663, 0.0
        %v696 = vmax.f32 %v664, 0.0
        %v697 = vpack.c.bf16 %v666, %v665
        %v698 = vpack.c.bf16 %v668, %v667
        %v699 = vpack.c.bf16 %v670, %v669
        %v700 = vpack.c.bf16 %v672, %v671
        %v701 = vpack.c.bf16 %v674, %v673
        %v702 = vpack.c.bf16 %v676, %v675
        %v703 = vpack.c.bf16 %v678, %v677
        %v704 = vpack.c.bf16 %v680, %v679
        %v705 = vpack.c.bf16 %v682, %v681
        %v706 = vpack.c.bf16 %v684, %v683
        %v707 = vpack.c.bf16 %v686, %v685
        %v708 = vpack.c.bf16 %v688, %v687
        %v709 = vpack.c.bf16 %v690, %v689
        %v710 = vpack.c.bf16 %v692, %v691
        %v711 = vpack.c.bf16 %v694, %v693
        %v712 = vpack.c.bf16 %v696, %v695
        %v729 = vunpack.c.l.b16 %v697
        %v730 = vunpack.c.h.b16 %v697
        %v731 = vunpack.c.l.b16 %v698
        %v732 = vunpack.c.h.b16 %v698
        %v733 = vunpack.c.l.b16 %v699
        %v734 = vunpack.c.h.b16 %v699
        %v735 = vunpack.c.l.b16 %v700
        %v736 = vunpack.c.h.b16 %v700
        %v737 = vunpack.c.l.b16 %v701
        %v738 = vunpack.c.h.b16 %v701
        %v739 = vunpack.c.l.b16 %v702
        %v740 = vunpack.c.h.b16 %v702
        %v741 = vunpack.c.l.b16 %v703
        %v742 = vunpack.c.h.b16 %v703
        %v743 = vunpack.c.l.b16 %v704
        %v744 = vunpack.c.h.b16 %v704
        %v745 = vunpack.c.l.b16 %v705
        %v746 = vunpack.c.h.b16 %v705
        %v747 = vunpack.c.l.b16 %v706
        %v748 = vunpack.c.h.b16 %v706
        %v749 = vunpack.c.l.b16 %v707
        %v750 = vunpack.c.h.b16 %v707
        %v751 = vunpack.c.l.b16 %v708
        %v752 = vunpack.c.h.b16 %v708
        %v753 = vunpack.c.l.b16 %v709
        %v754 = vunpack.c.h.b16 %v709
        %v755 = vunpack.c.l.b16 %v710
        %v756 = vunpack.c.h.b16 %v710
        %v757 = vunpack.c.l.b16 %v711
        %v758 = vunpack.c.h.b16 %v711
        %v759 = vunpack.c.l.b16 %v712
        %v760 = vunpack.c.h.b16 %v712
        %v761 = vpack.c.b16 %v729, %v729
        %v762 = vpack.c.b16 %v730, %v730
        %v763 = vpack.c.b16 %v731, %v731
        %v764 = vpack.c.b16 %v732, %v732
        %v765 = vpack.c.b16 %v733, %v733
        %v766 = vpack.c.b16 %v734, %v734
        %v767 = vpack.c.b16 %v735, %v735
        %v768 = vpack.c.b16 %v736, %v736
        %v769 = vpack.c.b16 %v737, %v737
        %v770 = vpack.c.b16 %v738, %v738
        %v771 = vpack.c.b16 %v739, %v739
        %v772 = vpack.c.b16 %v740, %v740
        %v773 = vpack.c.b16 %v741, %v741
        %v774 = vpack.c.b16 %v742, %v742
        %v775 = vpack.c.b16 %v743, %v743
        %v776 = vpack.c.b16 %v744, %v744
        %v777 = vpack.c.b16 %v745, %v745
        %v778 = vpack.c.b16 %v746, %v746
        %v779 = vpack.c.b16 %v747, %v747
        %v780 = vpack.c.b16 %v748, %v748
        %v781 = vpack.c.b16 %v749, %v749
        %v782 = vpack.c.b16 %v750, %v750
        %v783 = vpack.c.b16 %v751, %v751
        %v784 = vpack.c.b16 %v752, %v752
        %v785 = vpack.c.b16 %v753, %v753
        %v786 = vpack.c.b16 %v754, %v754
        %v787 = vpack.c.b16 %v755, %v755
        %v788 = vpack.c.b16 %v756, %v756
        %v789 = vpack.c.b16 %v757, %v757
        %v790 = vpack.c.b16 %v758, %v758
        %v791 = vpack.c.b16 %v759, %v759
        %v792 = vpack.c.b16 %v760, %v760
        %825 = vst [vmem:[%s230] sm:$0xf] %v761
        %826 = vst [vmem:[%s230 + $0x4] sm:$0xf] %v762
        %827 = vst [vmem:[%s230 + $0x8] sm:$0xf] %v763
        %828 = vst [vmem:[%s230 + $0xc] sm:$0xf] %v764
        %829 = vst [vmem:[%s230 + $0x10] sm:$0xf] %v765
        %830 = vst [vmem:[%s230 + $0x14] sm:$0xf] %v766
        %831 = vst [vmem:[%s230 + $0x18] sm:$0xf] %v767
        %832 = vst [vmem:[%s230 + $0x1c] sm:$0xf] %v768
        %833 = vst [vmem:[%s230 + $0x20] sm:$0xf] %v769
        %834 = vst [vmem:[%s230 + $0x24] sm:$0xf] %v770
        %835 = vst [vmem:[%s230 + $0x28] sm:$0xf] %v771
        %836 = vst [vmem:[%s230 + $0x2c] sm:$0xf] %v772
        %837 = vst [vmem:[%s230 + $0x30] sm:$0xf] %v773
        %838 = vst [vmem:[%s230 + $0x34] sm:$0xf] %v774
        %839 = vst [vmem:[%s230 + $0x38] sm:$0xf] %v775
        %840 = vst [vmem:[%s230 + $0x3c] sm:$0xf] %v776
        %841 = vst [vmem:[%s230 + $0x40] sm:$0xf] %v777
        %842 = vst [vmem:[%s230 + $0x44] sm:$0xf] %v778
        %843 = vst [vmem:[%s230 + $0x48] sm:$0xf] %v779
        %844 = vst [vmem:[%s230 + $0x4c] sm:$0xf] %v780
        %845 = vst [vmem:[%s230 + $0x50] sm:$0xf] %v781
        %846 = vst [vmem:[%s230 + $0x54] sm:$0xf] %v782
        %847 = vst [vmem:[%s230 + $0x58] sm:$0xf] %v783
        %848 = vst [vmem:[%s230 + $0x5c] sm:$0xf] %v784
        %849 = vst [vmem:[%s230 + $0x60] sm:$0xf] %v785
        %850 = vst [vmem:[%s230 + $0x64] sm:$0xf] %v786
        %851 = vst [vmem:[%s230 + $0x68] sm:$0xf] %v787
        %852 = vst [vmem:[%s230 + $0x6c] sm:$0xf] %v788
        %853 = vst [vmem:[%s230 + $0x70] sm:$0xf] %v789
        %854 = vst [vmem:[%s230 + $0x74] sm:$0xf] %v790
        %855 = vst [vmem:[%s230 + $0x78] sm:$0xf] %v791
        %856 = vst [vmem:[%s230 + $0x7c] sm:$0xf] %v792
        %s857 = sand.u32 %s119, 1
        %s858 = scalar_lea.sflag [#allocation4], %s857
        %s859 = sand.u32 %s119, 1
        %s860 = smul.addr %s859, 128
        %s861 = scalar_lea.vmem [#allocation7], %s860
        // Predicated region
        $region45: #{tpu_custom_call.1} parent=35 // pred_check
          %p862 = pneg %p129
        $region46: #{tpu_custom_call.1} parent=35 // pred_check_branch
          %864 = sbr.rel (%p862) target = $region48
        $region47: #{tpu_custom_call.1} parent=35 // pred_region
          %s865 = smul.u32 32, %s22
          %s867 = ssub.s32 2048, 2048
          %868 = vsyncadd %s858, %s867
          %s869 = smul.addr %s865, 64
          %s870 = scalar_lea.hbm %s4, %s869
          %s871 = sshll.u32 %s861, 4
          %s872 = int_to_ptr.vmem [resolvable:$true] %s871
          %877 = dma.vmem_to_hbm [thread:$0]  %s872, 2048, %s870, %s858, 64, 64, 4
        $region48: #{tpu_custom_call.1} parent=35 // pred_fallthru
          _
      $region36: #{tpu_custom_call.1} parent=5 // pred_fallthru
        _
      %p878 = scmp.le.s32.totalorder 2, %s17
      // Predicated region
      $region49: #{tpu_custom_call.1} parent=5 // pred_check
        %p879 = pneg %p878
      $region50: #{tpu_custom_call.1} parent=5 // pred_check_branch
        %881 = sbr.rel (%p879) target = $region52
      $region51: #{tpu_custom_call.1} parent=5 // pred_region
        %s882 = ssub.s32 %s17, 2
        // Predicated region
        $region53: #{tpu_custom_call.1} parent=51 // pred_check
          %p883 = pneg %p135
        $region54: #{tpu_custom_call.1} parent=51 // pred_check_branch
          %885 = sbr.rel (%p883) target = $region56
        $region55: #{tpu_custom_call.1} parent=51 // pred_region
          %s886 = sand.u32 %s120, 1
          %s887 = scalar_lea.sflag [#allocation4], %s886
          %s888 = sand.u32 %s120, 1
          %s889 = smul.addr %s888, 128
          %s890 = scalar_lea.vmem [#allocation7], %s889
          %891 = dma.done %s887, 2048
        $region56: #{tpu_custom_call.1} parent=51 // pred_fallthru
          _
      $region52: #{tpu_custom_call.1} parent=5 // pred_fallthru
        _
    $region6: #{tpu_custom_call.1} parent=1 // loop_footer
      %s21 = sadd.s32 1, %s17
    $region7: #{tpu_custom_call.1} parent=1 // loop_footer_branch
      %16 = sbr.rel target = $region3
    $region8: #{tpu_custom_call.1} parent=1 // loop_exit
      _
    %892 = vsyncpa [#allocation3], 1
    %s893 = scalar_lea.sflag [#allocation3], 1
    %894 = vsyncpa %s893, 1
    %895 = vsyncpa [#allocation6], 1
    %896 = vsyncpa [#allocation4], 1
    %s897 = scalar_lea.sflag [#allocation4], 1
    %898 = vsyncpa %s897, 1

</llo_original>
